<compile_context>
chip_gen: v5e
topology: v5e:2x2
jax: 0.10.0
libtpu: 0.0.40
codegen_flags: <defaults>
</compile_context>

<pallas_src>
import jax
import jax.numpy as jnp
from jax.experimental import pallas as pl
from jax.experimental.pallas import tpu as pltpu

M = 100            # logical hidden width (as in the PyTorch module)
OUTPUT_SIZE = 10   # logical output width
LANE = 128         # TPU lane width
SUBLANE = 8        # TPU sublane width
TILE_B_MAX = 1024  # rows per grid step (amortizes ~0.35 us per-step overhead)
MIN_SPLIT_B = 256  # only force >=2 grid steps (v7x two-TC sharding) above 2x this


def _round_up(x, m):
    return ((x + m - 1) // m) * m


def _pad2d(a, rows, cols):
    return jnp.pad(a, ((0, rows - a.shape[0]), (0, cols - a.shape[1])))


def mlp_kernel(x_ref,
               w1_ref, b1_ref,
               w2_ref, b2_ref,
               w3_ref, b3_ref,
               w4_ref, b4_ref,
               w5_ref, b5_ref,
               o_ref):
    # Entire MLP (5 matmuls + 4 ReLUs) fused; all weights stay VMEM-resident
    # across grid steps (constant index_map). Padded hidden lanes are zero so
    # the math matches the unpadded module exactly.
    h = x_ref[...]
    h = jnp.maximum(
        jnp.dot(h, w1_ref[...], preferred_element_type=jnp.float32) + b1_ref[...], 0.0)
    h = jnp.maximum(
        jnp.dot(h, w2_ref[...], preferred_element_type=jnp.float32) + b2_ref[...], 0.0)
    h = jnp.maximum(
        jnp.dot(h, w3_ref[...], preferred_element_type=jnp.float32) + b3_ref[...], 0.0)
    h = jnp.maximum(
        jnp.dot(h, w4_ref[...], preferred_element_type=jnp.float32) + b4_ref[...], 0.0)
    o_ref[...] = (
        jnp.dot(h, w5_ref[...], preferred_element_type=jnp.float32) + b5_ref[...]
    ).astype(o_ref.dtype)


def make_params(key, input_size, output_size):
    """Deterministic init mimicking PyTorch's default Linear init.

    Weights are stored transposed as (in, out) so the kernel computes
    y = x @ W + b, matching PyTorch's y = x @ W_pt.T + b.
    """
    sizes = [(input_size, M), (M, M), (M, M), (M, M), (M, output_size)]
    params = []
    for (fan_in, fan_out) in sizes:
        key, kw, kb = jax.random.split(key, 3)
        bound = 1.0 / jnp.sqrt(jnp.float32(fan_in))
        w = jax.random.uniform(kw, (fan_in, fan_out), jnp.float32, -bound, bound)
        b = jax.random.uniform(kb, (1, fan_out), jnp.float32, -bound, bound)
        params.append((w, b))
    return params


def prepare_params(params):
    """Pad hidden dims (100 -> 128 lanes) ONCE, outside the jitted forward.

    Only the hidden width is padded; the input feature dim and the output dim
    are left at their logical sizes (legal block shapes: full array dims).
    Zero padding keeps the math exact.
    """
    (w1, b1), (w2, b2), (w3, b3), (w4, b4), (w5, b5) = params
    in_dim = w1.shape[0]
    out_dim = w5.shape[1]
    h_pad = _round_up(M, LANE)
    return (
        (_pad2d(w1, in_dim, h_pad), _pad2d(b1, 1, h_pad)),
        (_pad2d(w2, h_pad, h_pad), _pad2d(b2, 1, h_pad)),
        (_pad2d(w3, h_pad, h_pad), _pad2d(b3, 1, h_pad)),
        (_pad2d(w4, h_pad, h_pad), _pad2d(b4, 1, h_pad)),
        (_pad2d(w5, h_pad, out_dim), _pad2d(b5, 1, out_dim)),
    )


@jax.jit
def net_forward(x, padded_params):
    batch, in_dim = x.shape
    (w1, b1), (w2, b2), (w3, b3), (w4, b4), (w5, b5) = padded_params
    h_pad = w2.shape[0]
    out_dim = w5.shape[1]

    # --- Batch tiling ------------------------------------------------------
    # Large batches: tile into <=TILE_B_MAX-row chunks with minimal padding.
    # Medium batches (>= 2*MIN_SPLIT_B): force 2 steps so v7x's two
    # TensorCores each get one (no effect on 1-TC v5e/v6e beyond a tiny step).
    n_steps = -(-batch // TILE_B_MAX)
    if n_steps == 1 and batch >= 2 * MIN_SPLIT_B:
        n_steps = 2
    tile_b = max(SUBLANE, _round_up(-(-batch // n_steps), SUBLANE))
    padded_b = tile_b * n_steps

    if padded_b != batch:
        # Row padding only (feature dim is passed through unpadded).
        x = jnp.pad(x, ((0, padded_b - batch), (0, 0)))

    x_spec = pl.BlockSpec((tile_b, in_dim), lambda i: (i, 0))
    out_spec = pl.BlockSpec((tile_b, out_dim), lambda i: (i, 0))

    def resident(a):
        # Constant index_map -> same block every grid step -> stays in VMEM.
        return pl.BlockSpec(a.shape, lambda i: (0, 0))

    weights = [w1, b1, w2, b2, w3, b3, w4, b4, w5, b5]
    in_specs = [x_spec] + [resident(a) for a in weights]

    flops = 2 * padded_b * (in_dim * h_pad + 3 * h_pad * h_pad + h_pad * out_dim)
    bytes_accessed = 4 * (padded_b * in_dim + padded_b * out_dim
                          + sum(int(a.size) for a in weights))
    cost = pl.CostEstimate(flops=flops, transcendentals=0,
                           bytes_accessed=bytes_accessed)

    out = pl.pallas_call(
        mlp_kernel,
        out_shape=jax.ShapeDtypeStruct((padded_b, out_dim), jnp.float32),
        grid=(n_steps,),
        in_specs=in_specs,
        out_specs=out_spec,
        compiler_params=pltpu.CompilerParams(
            dimension_semantics=("parallel",)),
        cost_estimate=cost,
    )(x, *weights)

    if padded_b != batch:
        out = out[:batch]
    return out


def net_forward_ref(x, params):
    h = x
    for i, (w, b) in enumerate(params):
        h = h @ w + b
        if i < len(params) - 1:
            h = jnp.maximum(h, 0.0)
    return h


if __name__ == "__main__":
    input_size = 32
    batch = 8

    key = jax.random.PRNGKey(0)
    kx, kp = jax.random.split(key)
    x = jax.random.normal(kx, (batch, input_size), jnp.float32)
    params = make_params(kp, input_size, OUTPUT_SIZE)

    # One-time padding of parameters (outside the jitted forward).
    padded_params = prepare_params(params)
    padded_params = jax.block_until_ready(padded_params)

    out = net_forward(x, padded_params)
    out = jax.block_until_ready(out)

    ref = net_forward_ref(x, params)
    assert out.shape == (batch, OUTPUT_SIZE), out.shape
    assert jnp.allclose(out, ref, atol=1e-4, rtol=1e-4)

    print("KERNEL_OK")
</pallas_src>

<mosaic_0001>
module attributes {stable_mosaic.version = 11 : i64} {
  func.func @mlp_kernel(%arg0: i32, %arg1: memref<8x32xf32, #tpu.memory_space<vmem>>, %arg2: memref<32x128xf32, #tpu.memory_space<vmem>>, %arg3: memref<1x128xf32, #tpu.memory_space<vmem>>, %arg4: memref<128x128xf32, #tpu.memory_space<vmem>>, %arg5: memref<1x128xf32, #tpu.memory_space<vmem>>, %arg6: memref<128x128xf32, #tpu.memory_space<vmem>>, %arg7: memref<1x128xf32, #tpu.memory_space<vmem>>, %arg8: memref<128x128xf32, #tpu.memory_space<vmem>>, %arg9: memref<1x128xf32, #tpu.memory_space<vmem>>, %arg10: memref<128x10xf32, #tpu.memory_space<vmem>>, %arg11: memref<1x10xf32, #tpu.memory_space<vmem>>, %arg12: memref<8x10xf32, #tpu.memory_space<vmem>>) attributes {dimension_semantics = [#tpu.dimension_semantics<parallel>], iteration_bounds = array<i64: 1>, scalar_prefetch = 0 : i64, scratch_operands = 0 : i64, tpu.core_type = #tpu.core_type<tc>, window_params = [{transform_indices = @transform_0, window_bounds = array<i64: 8, 32>}, {pipeline_mode = #tpu.pipeline_mode<synchronous>, transform_indices = @transform_1, window_bounds = array<i64: 32, 128>}, {pipeline_mode = #tpu.pipeline_mode<synchronous>, transform_indices = @transform_2, window_bounds = array<i64: 1, 128>}, {pipeline_mode = #tpu.pipeline_mode<synchronous>, transform_indices = @transform_3, window_bounds = array<i64: 128, 128>}, {pipeline_mode = #tpu.pipeline_mode<synchronous>, transform_indices = @transform_4, window_bounds = array<i64: 1, 128>}, {pipeline_mode = #tpu.pipeline_mode<synchronous>, transform_indices = @transform_5, window_bounds = array<i64: 128, 128>}, {pipeline_mode = #tpu.pipeline_mode<synchronous>, transform_indices = @transform_6, window_bounds = array<i64: 1, 128>}, {pipeline_mode = #tpu.pipeline_mode<synchronous>, transform_indices = @transform_7, window_bounds = array<i64: 128, 128>}, {pipeline_mode = #tpu.pipeline_mode<synchronous>, transform_indices = @transform_8, window_bounds = array<i64: 1, 128>}, {pipeline_mode = #tpu.pipeline_mode<synchronous>, transform_indices = @transform_9, window_bounds = array<i64: 128, 10>}, {pipeline_mode = #tpu.pipeline_mode<synchronous>, transform_indices = @transform_10, window_bounds = array<i64: 1, 10>}, {transform_indices = @transform_11, window_bounds = array<i64: 8, 10>}]} {
    %c0 = arith.constant 0 : index
    %c0_0 = arith.constant 0 : index
    %0 = vector.load %arg1[%c0, %c0_0] : memref<8x32xf32, #tpu.memory_space<vmem>>, vector<8x32xf32>
    %c0_1 = arith.constant 0 : index
    %c0_2 = arith.constant 0 : index
    %1 = vector.load %arg2[%c0_1, %c0_2] : memref<32x128xf32, #tpu.memory_space<vmem>>, vector<32x128xf32>
    %cst = arith.constant dense<0.000000e+00> : vector<8x128xf32>
    %2 = tpu.matmul %0, %1, %cst {dimension_numbers = #tpu.dot_dimension_numbers<[1], [0], [0], [1], [0, 0, 1, 1], [], []>} : vector<8x32xf32>, vector<32x128xf32>, vector<8x128xf32> -> vector<8x128xf32>
    %c0_3 = arith.constant 0 : index
    %c0_4 = arith.constant 0 : index
    %3 = vector.load %arg3[%c0_3, %c0_4] : memref<1x128xf32, #tpu.memory_space<vmem>>, vector<1x128xf32>
    %4 = vector.broadcast %3 : vector<1x128xf32> to vector<8x128xf32>
    %5 = arith.addf %2, %4 : vector<8x128xf32>
    %cst_5 = arith.constant 0.000000e+00 : f32
    %6 = vector.broadcast %cst_5 : f32 to vector<8x128xf32>
    %7 = arith.maximumf %5, %6 : vector<8x128xf32>
    %c0_6 = arith.constant 0 : index
    %c0_7 = arith.constant 0 : index
    %8 = vector.load %arg4[%c0_6, %c0_7] : memref<128x128xf32, #tpu.memory_space<vmem>>, vector<128x128xf32>
    %cst_8 = arith.constant dense<0.000000e+00> : vector<8x128xf32>
    %9 = tpu.matmul %7, %8, %cst_8 {dimension_numbers = #tpu.dot_dimension_numbers<[1], [0], [0], [1], [0, 0, 1, 1], [], []>} : vector<8x128xf32>, vector<128x128xf32>, vector<8x128xf32> -> vector<8x128xf32>
    %c0_9 = arith.constant 0 : index
    %c0_10 = arith.constant 0 : index
    %10 = vector.load %arg5[%c0_9, %c0_10] : memref<1x128xf32, #tpu.memory_space<vmem>>, vector<1x128xf32>
    %11 = vector.broadcast %10 : vector<1x128xf32> to vector<8x128xf32>
    %12 = arith.addf %9, %11 : vector<8x128xf32>
    %cst_11 = arith.constant 0.000000e+00 : f32
    %13 = vector.broadcast %cst_11 : f32 to vector<8x128xf32>
    %14 = arith.maximumf %12, %13 : vector<8x128xf32>
    %c0_12 = arith.constant 0 : index
    %c0_13 = arith.constant 0 : index
    %15 = vector.load %arg6[%c0_12, %c0_13] : memref<128x128xf32, #tpu.memory_space<vmem>>, vector<128x128xf32>
    %cst_14 = arith.constant dense<0.000000e+00> : vector<8x128xf32>
    %16 = tpu.matmul %14, %15, %cst_14 {dimension_numbers = #tpu.dot_dimension_numbers<[1], [0], [0], [1], [0, 0, 1, 1], [], []>} : vector<8x128xf32>, vector<128x128xf32>, vector<8x128xf32> -> vector<8x128xf32>
    %c0_15 = arith.constant 0 : index
    %c0_16 = arith.constant 0 : index
    %17 = vector.load %arg7[%c0_15, %c0_16] : memref<1x128xf32, #tpu.memory_space<vmem>>, vector<1x128xf32>
    %18 = vector.broadcast %17 : vector<1x128xf32> to vector<8x128xf32>
    %19 = arith.addf %16, %18 : vector<8x128xf32>
    %cst_17 = arith.constant 0.000000e+00 : f32
    %20 = vector.broadcast %cst_17 : f32 to vector<8x128xf32>
    %21 = arith.maximumf %19, %20 : vector<8x128xf32>
    %c0_18 = arith.constant 0 : index
    %c0_19 = arith.constant 0 : index
    %22 = vector.load %arg8[%c0_18, %c0_19] : memref<128x128xf32, #tpu.memory_space<vmem>>, vector<128x128xf32>
    %cst_20 = arith.constant dense<0.000000e+00> : vector<8x128xf32>
    %23 = tpu.matmul %21, %22, %cst_20 {dimension_numbers = #tpu.dot_dimension_numbers<[1], [0], [0], [1], [0, 0, 1, 1], [], []>} : vector<8x128xf32>, vector<128x128xf32>, vector<8x128xf32> -> vector<8x128xf32>
    %c0_21 = arith.constant 0 : index
    %c0_22 = arith.constant 0 : index
    %24 = vector.load %arg9[%c0_21, %c0_22] : memref<1x128xf32, #tpu.memory_space<vmem>>, vector<1x128xf32>
    %25 = vector.broadcast %24 : vector<1x128xf32> to vector<8x128xf32>
    %26 = arith.addf %23, %25 : vector<8x128xf32>
    %cst_23 = arith.constant 0.000000e+00 : f32
    %27 = vector.broadcast %cst_23 : f32 to vector<8x128xf32>
    %28 = arith.maximumf %26, %27 : vector<8x128xf32>
    %c0_24 = arith.constant 0 : index
    %c0_25 = arith.constant 0 : index
    %29 = vector.load %arg10[%c0_24, %c0_25] : memref<128x10xf32, #tpu.memory_space<vmem>>, vector<128x10xf32>
    %cst_26 = arith.constant dense<0.000000e+00> : vector<8x10xf32>
    %30 = tpu.matmul %28, %29, %cst_26 {dimension_numbers = #tpu.dot_dimension_numbers<[1], [0], [0], [1], [0, 0, 1, 1], [], []>} : vector<8x128xf32>, vector<128x10xf32>, vector<8x10xf32> -> vector<8x10xf32>
    %c0_27 = arith.constant 0 : index
    %c0_28 = arith.constant 0 : index
    %31 = vector.load %arg11[%c0_27, %c0_28] : memref<1x10xf32, #tpu.memory_space<vmem>>, vector<1x10xf32>
    %32 = vector.broadcast %31 : vector<1x10xf32> to vector<8x10xf32>
    %33 = arith.addf %30, %32 : vector<8x10xf32>
    %c0_29 = arith.constant 0 : index
    %c0_30 = arith.constant 0 : index
    %34 = vector.load %arg12[%c0_29, %c0_30] : memref<8x10xf32, #tpu.memory_space<vmem>>, vector<8x10xf32>
    tpu.vector_store %arg12[%c0_29, %c0_30], %33 {strides = array<i32>} : memref<8x10xf32, #tpu.memory_space<vmem>>, vector<8x10xf32>,
    return
  }
  func.func @transform_0(%arg0: i32) -> (i32, i32) {
    %c0_i32 = arith.constant 0 : i32
    %c0_i32_0 = arith.constant 0 : i32
    return %arg0, %c0_i32 : i32, i32
  }
  func.func @transform_1(%arg0: i32) -> (i32, i32) {
    %c0_i32 = arith.constant 0 : i32
    %c0_i32_0 = arith.constant 0 : i32
    %c0_i32_1 = arith.constant 0 : i32
    return %c0_i32, %c0_i32_0 : i32, i32
  }
  func.func @transform_2(%arg0: i32) -> (i32, i32) {
    %c0_i32 = arith.constant 0 : i32
    %c0_i32_0 = arith.constant 0 : i32
    %c0_i32_1 = arith.constant 0 : i32
    return %c0_i32, %c0_i32_0 : i32, i32
  }
  func.func @transform_3(%arg0: i32) -> (i32, i32) {
    %c0_i32 = arith.constant 0 : i32
    %c0_i32_0 = arith.constant 0 : i32
    %c0_i32_1 = arith.constant 0 : i32
    return %c0_i32, %c0_i32_0 : i32, i32
  }
  func.func @transform_4(%arg0: i32) -> (i32, i32) {
    %c0_i32 = arith.constant 0 : i32
    %c0_i32_0 = arith.constant 0 : i32
    %c0_i32_1 = arith.constant 0 : i32
    return %c0_i32, %c0_i32_0 : i32, i32
  }
  func.func @transform_5(%arg0: i32) -> (i32, i32) {
    %c0_i32 = arith.constant 0 : i32
    %c0_i32_0 = arith.constant 0 : i32
    %c0_i32_1 = arith.constant 0 : i32
    return %c0_i32, %c0_i32_0 : i32, i32
  }
  func.func @transform_6(%arg0: i32) -> (i32, i32) {
    %c0_i32 = arith.constant 0 : i32
    %c0_i32_0 = arith.constant 0 : i32
    %c0_i32_1 = arith.constant 0 : i32
    return %c0_i32, %c0_i32_0 : i32, i32
  }
  func.func @transform_7(%arg0: i32) -> (i32, i32) {
    %c0_i32 = arith.constant 0 : i32
    %c0_i32_0 = arith.constant 0 : i32
    %c0_i32_1 = arith.constant 0 : i32
    return %c0_i32, %c0_i32_0 : i32, i32
  }
  func.func @transform_8(%arg0: i32) -> (i32, i32) {
    %c0_i32 = arith.constant 0 : i32
    %c0_i32_0 = arith.constant 0 : i32
    %c0_i32_1 = arith.constant 0 : i32
    return %c0_i32, %c0_i32_0 : i32, i32
  }
  func.func @transform_9(%arg0: i32) -> (i32, i32) {
    %c0_i32 = arith.constant 0 : i32
    %c0_i32_0 = arith.constant 0 : i32
    %c0_i32_1 = arith.constant 0 : i32
    return %c0_i32, %c0_i32_0 : i32, i32
  }
  func.func @transform_10(%arg0: i32) -> (i32, i32) {
    %c0_i32 = arith.constant 0 : i32
    %c0_i32_0 = arith.constant 0 : i32
    %c0_i32_1 = arith.constant 0 : i32
    return %c0_i32, %c0_i32_0 : i32, i32
  }
  func.func @transform_11(%arg0: i32) -> (i32, i32) {
    %c0_i32 = arith.constant 0 : i32
    %c0_i32_0 = arith.constant 0 : i32
    return %arg0, %c0_i32 : i32, i32
  }
}

</mosaic_0001>

<llo_original>
// kernel: net_forward.1
$region0: #{net_forward.1}
  #allocation0 [shape = 'u32[]', space=smem, size = 0x4, offset = 0x4, fixed_abs, tag = 'smem constant byte address 0x4 - core index']
  #allocation1 [shape = 'u32[72,128]{1,0:T(1,128)}', space=vmem, size = 0x9000, scoped, tag = 'internal scratch']
  %s0 = inlined_call_operand.vmem [shape: f32[8,32], index: 0, kind: input, shape index: {}]
  %s1 = inlined_call_operand.hbm [shape: f32[32,128], index: 1, kind: input, shape index: {}]
  %s2 = inlined_call_operand.vmem [shape: f32[1,128], index: 2, kind: input, shape index: {}]
  %s3 = inlined_call_operand.vmem [shape: f32[128,128], index: 3, kind: input, shape index: {}]
  %s4 = inlined_call_operand.vmem [shape: f32[1,128], index: 4, kind: input, shape index: {}]
  %s5 = inlined_call_operand.hbm [shape: f32[128,128], index: 5, kind: input, shape index: {}]
  %s6 = inlined_call_operand.vmem [shape: f32[1,128], index: 6, kind: input, shape index: {}]
  %s7 = inlined_call_operand.hbm [shape: f32[128,128], index: 7, kind: input, shape index: {}]
  %s8 = inlined_call_operand.vmem [shape: f32[1,128], index: 8, kind: input, shape index: {}]
  %s9 = inlined_call_operand.vmem [shape: f32[128,10], index: 9, kind: input, shape index: {}]
  %s10 = inlined_call_operand.vmem [shape: f32[1,10], index: 10, kind: input, shape index: {}]
  %s11 = inlined_call_operand.hbm [shape: f32[8,10], index: 11, kind: output, shape index: {}]
  %s12 = sld [smem:[#allocation0]]
  $region66: #{net_forward.1} parent=0
    _
  %s14 = ssub.s32 1, %s12
  %s15 = scalar_select 0, %s14, %s12
  $region1: #{net_forward.1} parent=0
    #allocation2 [shape = 'u8[16384]{0}', space=vmem, size = 0x4000, scoped, tag = 'input window, operand 1, single buffered']
    #allocation3 [shape = 's32[1]{0}', space=sflag, size = 0x4, scoped, tag = 'scoped memory for net_forward.1']
    #allocation4 [shape = 's32[1]{0}', space=sflag, size = 0x4, scoped, tag = 'scoped memory for net_forward.1']
    #allocation5 [shape = 'u8[65536]{0}', space=vmem, size = 0x10000, scoped, tag = 'input window, operand 5, single buffered']
    #allocation6 [shape = 's32[1]{0}', space=sflag, size = 0x4, scoped, tag = 'scoped memory for net_forward.1']
    #allocation7 [shape = 'u8[65536]{0}', space=vmem, size = 0x10000, scoped, tag = 'input window, operand 7, single buffered']
    #allocation8 [shape = 'u8[4096]{0}', space=vmem, size = 0x1000, scoped, tag = 'output window, operand 0, single buffered']
    %16 = vsyncpa [#allocation3], 0
    %17 = vsyncpa [#allocation6], 0
    %18 = vsyncpa [#allocation4], 0
    // Predicated region
    $region2: #{net_forward.1} parent=1 // pred_check
      _
    $region3: #{net_forward.1} parent=1 // pred_check_branch
      %20 = sbr.rel (0) target = $region5
    $region4: #{net_forward.1} parent=1 // pred_region
      _
    $region5: #{net_forward.1} parent=1 // pred_fallthru
      _
    // Predicated region
    $region6: #{net_forward.1} parent=1 // pred_check
      _
    $region7: #{net_forward.1} parent=1 // pred_check_branch
      %22 = sbr.rel (0) target = $region9
    $region8: #{net_forward.1} parent=1 // pred_region
      %24 = vsyncadd [#allocation3], 0
      %s25 = sshll.u32 %s1, 4
      %s26 = int_to_ptr.hbm [resolvable:$true] %s25
      %s27 = sshll.u32 [#allocation2], 4
      %s28 = int_to_ptr.vmem [resolvable:$true] %s27
      %33 = dma.hbm_to_vmem [thread:$0]  %s26, 512, %s28, [#allocation3], 128, 128, 8
    $region9: #{net_forward.1} parent=1 // pred_fallthru
      _
    // Predicated region
    $region10: #{net_forward.1} parent=1 // pred_check
      _
    $region11: #{net_forward.1} parent=1 // pred_check_branch
      %35 = sbr.rel (0) target = $region13
    $region12: #{net_forward.1} parent=1 // pred_region
      _
    $region13: #{net_forward.1} parent=1 // pred_fallthru
      _
    // Predicated region
    $region14: #{net_forward.1} parent=1 // pred_check
      _
    $region15: #{net_forward.1} parent=1 // pred_check_branch
      %37 = sbr.rel (0) target = $region17
    $region16: #{net_forward.1} parent=1 // pred_region
      _
    $region17: #{net_forward.1} parent=1 // pred_fallthru
      _
    // Predicated region
    $region18: #{net_forward.1} parent=1 // pred_check
      _
    $region19: #{net_forward.1} parent=1 // pred_check_branch
      %39 = sbr.rel (0) target = $region21
    $region20: #{net_forward.1} parent=1 // pred_region
      _
    $region21: #{net_forward.1} parent=1 // pred_fallthru
      _
    // Predicated region
    $region22: #{net_forward.1} parent=1 // pred_check
      _
    $region23: #{net_forward.1} parent=1 // pred_check_branch
      %41 = sbr.rel (0) target = $region25
    $region24: #{net_forward.1} parent=1 // pred_region
      %43 = vsyncadd [#allocation6], 0
      %s44 = sshll.u32 %s5, 4
      %s45 = int_to_ptr.hbm [resolvable:$true] %s44
      %s46 = sshll.u32 [#allocation5], 4
      %s47 = int_to_ptr.vmem [resolvable:$true] %s46
      %52 = dma.hbm_to_vmem [thread:$0]  %s45, 2048, %s47, [#allocation6], 128, 128, 8
    $region25: #{net_forward.1} parent=1 // pred_fallthru
      _
    // Predicated region
    $region26: #{net_forward.1} parent=1 // pred_check
      _
    $region27: #{net_forward.1} parent=1 // pred_check_branch
      %54 = sbr.rel (0) target = $region29
    $region28: #{net_forward.1} parent=1 // pred_region
      _
    $region29: #{net_forward.1} parent=1 // pred_fallthru
      _
    // Predicated region
    $region30: #{net_forward.1} parent=1 // pred_check
      _
    $region31: #{net_forward.1} parent=1 // pred_check_branch
      %56 = sbr.rel (0) target = $region33
    $region32: #{net_forward.1} parent=1 // pred_region
      %58 = vsyncadd [#allocation6], 0
      %s59 = sshll.u32 %s7, 4
      %s60 = int_to_ptr.hbm [resolvable:$true] %s59
      %s61 = sshll.u32 [#allocation7], 4
      %s62 = int_to_ptr.vmem [resolvable:$true] %s61
      %67 = dma.hbm_to_vmem [thread:$0]  %s60, 2048, %s62, [#allocation6], 128, 128, 8
    $region33: #{net_forward.1} parent=1 // pred_fallthru
      _
    // Predicated region
    $region34: #{net_forward.1} parent=1 // pred_check
      _
    $region35: #{net_forward.1} parent=1 // pred_check_branch
      %69 = sbr.rel (0) target = $region37
    $region36: #{net_forward.1} parent=1 // pred_region
      _
    $region37: #{net_forward.1} parent=1 // pred_fallthru
      _
    // Predicated region
    $region38: #{net_forward.1} parent=1 // pred_check
      _
    $region39: #{net_forward.1} parent=1 // pred_check_branch
      %71 = sbr.rel (0) target = $region41
    $region40: #{net_forward.1} parent=1 // pred_region
      _
    $region41: #{net_forward.1} parent=1 // pred_fallthru
      _
    // Predicated region
    $region42: #{net_forward.1} parent=1 // pred_check
      _
    $region43: #{net_forward.1} parent=1 // pred_check_branch
      %73 = sbr.rel (0) target = $region45
    $region44: #{net_forward.1} parent=1 // pred_region
      _
    $region45: #{net_forward.1} parent=1 // pred_fallthru
      _
    // Predicated region
    $region46: #{net_forward.1} parent=1 // pred_check
      _
    $region47: #{net_forward.1} parent=1 // pred_check_branch
      %75 = sbr.rel (0) target = $region49
    $region48: #{net_forward.1} parent=1 // pred_region
      %77 = dma.done [#allocation3], 512
    $region49: #{net_forward.1} parent=1 // pred_fallthru
      _
    // Predicated region
    $region50: #{net_forward.1} parent=1 // pred_check
      _
    $region51: #{net_forward.1} parent=1 // pred_check_branch
      %79 = sbr.rel (0) target = $region53
    $region52: #{net_forward.1} parent=1 // pred_region
      %81 = dma.done [#allocation6], 2048
    $region53: #{net_forward.1} parent=1 // pred_fallthru
      _
    // Predicated region
    $region54: #{net_forward.1} parent=1 // pred_check
      _
    $region55: #{net_forward.1} parent=1 // pred_check_branch
      %83 = sbr.rel (0) target = $region57
    $region56: #{net_forward.1} parent=1 // pred_region
      %85 = dma.done [#allocation6], 2048
    $region57: #{net_forward.1} parent=1 // pred_fallthru
      _
    %v86 = vld [vmem:[%s0] sm:$0xff]
    %v87 = vld [vmem:[#allocation2] sm:$0xff]
    %v88 = vld [vmem:[#allocation2 + $0x8] sm:$0xff]
    %v89 = vld [vmem:[#allocation2 + $0x10] sm:$0xff]
    %v90 = vld [vmem:[#allocation2 + $0x18] sm:$0xff]
    %v91 = vld [vmem:[%s2] sm:$0x1]
    %v93 = vperm.slane %v91, 0
    %vm95 = vcmask 261120
    %v97 = vsel %vm95, %v86, 0
    %99 = vmatpush.msra.mxu0 0.0
    %100 = vmatpush.msra.mxu0 0.0
    %101 = vmatpush.msra.mxu0 0.0
    %102 = vmatpush.msra.mxu0 0.0
    %103 = vmatpush.msra.mxu0 0.0
    %104 = vmatpush.msra.mxu0 0.0
    %105 = vmatpush.msra.mxu0 0.0
    %106 = vmatpush.msra.mxu0 0.0
    %107 = vmatpush.msra.mxu0 0.0
    %108 = vmatpush.msra.mxu0 0.0
    %109 = vmatpush.msra.mxu0 0.0
    %110 = vmatpush.msra.mxu0 0.0
    %111 = vmatpush.msra.mxu0 %v90
    %112 = vmatpush.msra.mxu0 %v89
    %113 = vmatpush.msra.mxu0 %v88
    %114 = vmatpush.msra.mxu0 %v87
    %115 = vmatmul.f32.gmra.mxu0 %v97
    %v116 = vpop.f32.mrf.mxu0
    %v117 = vadd.f32 %v93, %v116
    %118 = vdwg.mxu0
    %v119 = vmax.f32 %v117, 0.0
    %v120 = vld [vmem:[%s3] sm:$0xff]
    %v121 = vld [vmem:[%s3 + $0x8] sm:$0xff]
    %v122 = vld [vmem:[%s3 + $0x10] sm:$0xff]
    %v123 = vld [vmem:[%s3 + $0x18] sm:$0xff]
    %v124 = vld [vmem:[%s3 + $0x20] sm:$0xff]
    %v125 = vld [vmem:[%s3 + $0x28] sm:$0xff]
    %v126 = vld [vmem:[%s3 + $0x30] sm:$0xff]
    %v127 = vld [vmem:[%s3 + $0x38] sm:$0xff]
    %v128 = vld [vmem:[%s3 + $0x40] sm:$0xff]
    %v129 = vld [vmem:[%s3 + $0x48] sm:$0xff]
    %v130 = vld [vmem:[%s3 + $0x50] sm:$0xff]
    %v131 = vld [vmem:[%s3 + $0x58] sm:$0xff]
    %v132 = vld [vmem:[%s3 + $0x60] sm:$0xff]
    %v133 = vld [vmem:[%s3 + $0x68] sm:$0xff]
    %v134 = vld [vmem:[%s3 + $0x70] sm:$0xff]
    %v135 = vld [vmem:[%s3 + $0x78] sm:$0xff]
    %v136 = vld [vmem:[%s4] sm:$0x1]
    %v138 = vperm.slane %v136, 0
    %140 = vmatpush.msra.mxu0 %v135
    %141 = vmatpush.msra.mxu0 %v134
    %142 = vmatpush.msra.mxu0 %v133
    %143 = vmatpush.msra.mxu0 %v132
    %144 = vmatpush.msra.mxu0 %v131
    %145 = vmatpush.msra.mxu0 %v130
    %146 = vmatpush.msra.mxu0 %v129
    %147 = vmatpush.msra.mxu0 %v128
    %148 = vmatpush.msra.mxu0 %v127
    %149 = vmatpush.msra.mxu0 %v126
    %150 = vmatpush.msra.mxu0 %v125
    %151 = vmatpush.msra.mxu0 %v124
    %152 = vmatpush.msra.mxu0 %v123
    %153 = vmatpush.msra.mxu0 %v122
    %154 = vmatpush.msra.mxu0 %v121
    %155 = vmatpush.msra.mxu0 %v120
    %156 = vmatmul.f32.gmra.mxu0 %v119
    %v157 = vpop.f32.mrf.mxu0
    %v158 = vadd.f32 %v138, %v157
    %159 = vdwg.mxu0
    %v160 = vmax.f32 %v158, 0.0
    %v161 = vld [vmem:[#allocation5] sm:$0xff]
    %v162 = vld [vmem:[#allocation5 + $0x8] sm:$0xff]
    %v163 = vld [vmem:[#allocation5 + $0x10] sm:$0xff]
    %v164 = vld [vmem:[#allocation5 + $0x18] sm:$0xff]
    %v165 = vld [vmem:[#allocation5 + $0x20] sm:$0xff]
    %v166 = vld [vmem:[#allocation5 + $0x28] sm:$0xff]
    %v167 = vld [vmem:[#allocation5 + $0x30] sm:$0xff]
    %v168 = vld [vmem:[#allocation5 + $0x38] sm:$0xff]
    %v169 = vld [vmem:[#allocation5 + $0x40] sm:$0xff]
    %v170 = vld [vmem:[#allocation5 + $0x48] sm:$0xff]
    %v171 = vld [vmem:[#allocation5 + $0x50] sm:$0xff]
    %v172 = vld [vmem:[#allocation5 + $0x58] sm:$0xff]
    %v173 = vld [vmem:[#allocation5 + $0x60] sm:$0xff]
    %v174 = vld [vmem:[#allocation5 + $0x68] sm:$0xff]
    %v175 = vld [vmem:[#allocation5 + $0x70] sm:$0xff]
    %v176 = vld [vmem:[#allocation5 + $0x78] sm:$0xff]
    %v177 = vld [vmem:[%s6] sm:$0x1]
    %v179 = vperm.slane %v177, 0
    %181 = vmatpush.msra.mxu0 %v176
    %182 = vmatpush.msra.mxu0 %v175
    %183 = vmatpush.msra.mxu0 %v174
    %184 = vmatpush.msra.mxu0 %v173
    %185 = vmatpush.msra.mxu0 %v172
    %186 = vmatpush.msra.mxu0 %v171
    %187 = vmatpush.msra.mxu0 %v170
    %188 = vmatpush.msra.mxu0 %v169
    %189 = vmatpush.msra.mxu0 %v168
    %190 = vmatpush.msra.mxu0 %v167
    %191 = vmatpush.msra.mxu0 %v166
    %192 = vmatpush.msra.mxu0 %v165
    %193 = vmatpush.msra.mxu0 %v164
    %194 = vmatpush.msra.mxu0 %v163
    %195 = vmatpush.msra.mxu0 %v162
    %196 = vmatpush.msra.mxu0 %v161
    %197 = vmatmul.f32.gmra.mxu0 %v160
    %v198 = vpop.f32.mrf.mxu0
    %v199 = vadd.f32 %v179, %v198
    %200 = vdwg.mxu0
    %v201 = vmax.f32 %v199, 0.0
    %v202 = vld [vmem:[#allocation7] sm:$0xff]
    %v203 = vld [vmem:[#allocation7 + $0x8] sm:$0xff]
    %v204 = vld [vmem:[#allocation7 + $0x10] sm:$0xff]
    %v205 = vld [vmem:[#allocation7 + $0x18] sm:$0xff]
    %v206 = vld [vmem:[#allocation7 + $0x20] sm:$0xff]
    %v207 = vld [vmem:[#allocation7 + $0x28] sm:$0xff]
    %v208 = vld [vmem:[#allocation7 + $0x30] sm:$0xff]
    %v209 = vld [vmem:[#allocation7 + $0x38] sm:$0xff]
    %v210 = vld [vmem:[#allocation7 + $0x40] sm:$0xff]
    %v211 = vld [vmem:[#allocation7 + $0x48] sm:$0xff]
    %v212 = vld [vmem:[#allocation7 + $0x50] sm:$0xff]
    %v213 = vld [vmem:[#allocation7 + $0x58] sm:$0xff]
    %v214 = vld [vmem:[#allocation7 + $0x60] sm:$0xff]
    %v215 = vld [vmem:[#allocation7 + $0x68] sm:$0xff]
    %v216 = vld [vmem:[#allocation7 + $0x70] sm:$0xff]
    %v217 = vld [vmem:[#allocation7 + $0x78] sm:$0xff]
    %v218 = vld [vmem:[%s8] sm:$0x1]
    %v220 = vperm.slane %v218, 0
    %222 = vmatpush.msra.mxu0 %v217
    %223 = vmatpush.msra.mxu0 %v216
    %224 = vmatpush.msra.mxu0 %v215
    %225 = vmatpush.msra.mxu0 %v214
    %226 = vmatpush.msra.mxu0 %v213
    %227 = vmatpush.msra.mxu0 %v212
    %228 = vmatpush.msra.mxu0 %v211
    %229 = vmatpush.msra.mxu0 %v210
    %230 = vmatpush.msra.mxu0 %v209
    %231 = vmatpush.msra.mxu0 %v208
    %232 = vmatpush.msra.mxu0 %v207
    %233 = vmatpush.msra.mxu0 %v206
    %234 = vmatpush.msra.mxu0 %v205
    %235 = vmatpush.msra.mxu0 %v204
    %236 = vmatpush.msra.mxu0 %v203
    %237 = vmatpush.msra.mxu0 %v202
    %238 = vmatmul.f32.gmra.mxu0 %v201
    %v239 = vpop.f32.mrf.mxu0
    %v240 = vadd.f32 %v220, %v239
    %241 = vdwg.mxu0
    %v242 = vmax.f32 %v240, 0.0
    %v243 = vld [vmem:[%s9] sm:$0xff]
    %v244 = vld [vmem:[%s9 + $0x8] sm:$0xff]
    %v245 = vld [vmem:[%s9 + $0x10] sm:$0xff]
    %v246 = vld [vmem:[%s9 + $0x18] sm:$0xff]
    %v247 = vld [vmem:[%s9 + $0x20] sm:$0xff]
    %v248 = vld [vmem:[%s9 + $0x28] sm:$0xff]
    %v249 = vld [vmem:[%s9 + $0x30] sm:$0xff]
    %v250 = vld [vmem:[%s9 + $0x38] sm:$0xff]
    %v251 = vld [vmem:[%s9 + $0x40] sm:$0xff]
    %v252 = vld [vmem:[%s9 + $0x48] sm:$0xff]
    %v253 = vld [vmem:[%s9 + $0x50] sm:$0xff]
    %v254 = vld [vmem:[%s9 + $0x58] sm:$0xff]
    %v255 = vld [vmem:[%s9 + $0x60] sm:$0xff]
    %v256 = vld [vmem:[%s9 + $0x68] sm:$0xff]
    %v257 = vld [vmem:[%s9 + $0x70] sm:$0xff]
    %v258 = vld [vmem:[%s9 + $0x78] sm:$0xff]
    %v259 = vld [vmem:[%s10] sm:$0x1]
    %v261 = vperm.slane %v259, 0
    %263 = vmatpush.msra.mxu0 %v258
    %264 = vmatpush.msra.mxu0 %v257
    %265 = vmatpush.msra.mxu0 %v256
    %266 = vmatpush.msra.mxu0 %v255
    %267 = vmatpush.msra.mxu0 %v254
    %268 = vmatpush.msra.mxu0 %v253
    %269 = vmatpush.msra.mxu0 %v252
    %270 = vmatpush.msra.mxu0 %v251
    %271 = vmatpush.msra.mxu0 %v250
    %272 = vmatpush.msra.mxu0 %v249
    %273 = vmatpush.msra.mxu0 %v248
    %274 = vmatpush.msra.mxu0 %v247
    %275 = vmatpush.msra.mxu0 %v246
    %276 = vmatpush.msra.mxu0 %v245
    %277 = vmatpush.msra.mxu0 %v244
    %278 = vmatpush.msra.mxu0 %v243
    %279 = vmatmul.f32.gmra.mxu0 %v242
    %v280 = vpop.f32.mrf.mxu0
    %v281 = vadd.f32 %v261, %v280
    %282 = vdwg.mxu0
    %vm283 = vcmask 80896
    %284 = vst.msk [vmem:[#allocation8] sm:$0xff] %vm283, %v281
    // Predicated region
    $region58: #{net_forward.1} parent=1 // pred_check
      _
    $region59: #{net_forward.1} parent=1 // pred_check_branch
      %286 = sbr.rel (0) target = $region61
    $region60: #{net_forward.1} parent=1 // pred_region
      %288 = vsyncadd [#allocation4], 0
      %s290 = sshll.u32 [#allocation8], 4
      %s291 = int_to_ptr.vmem [resolvable:$true] %s290
      %s292 = sshll.u32 %s11, 4
      %s293 = int_to_ptr.hbm [resolvable:$true] %s292
      %295 = dma.vmem_to_hbm [thread:$0]  %s291, 128, %s293, [#allocation4]
    $region61: #{net_forward.1} parent=1 // pred_fallthru
      _
    // Predicated region
    $region62: #{net_forward.1} parent=1 // pred_check
      _
    $region63: #{net_forward.1} parent=1 // pred_check_branch
      %297 = sbr.rel (0) target = $region65
    $region64: #{net_forward.1} parent=1 // pred_region
      %299 = dma.done [#allocation4], 128
    $region65: #{net_forward.1} parent=1 // pred_fallthru
      _
    %300 = vsyncpa [#allocation3], 1
    %301 = vsyncpa [#allocation6], 1
    %302 = vsyncpa [#allocation4], 1

</llo_original>
